<compile_context>
chip_gen: v7x
topology: tpu7x:2x2x1
jax: 0.10.0
libtpu: 0.0.40
codegen_flags: <defaults>
</compile_context>

<pallas_src>
import math

import jax
import jax.numpy as jnp
from jax import lax
from jax.experimental import pallas as pl
from jax.experimental.pallas import tpu as pltpu


def _round_up(x, m):
    return ((x + m - 1) // m) * m


def _matmul_bias_kernel(a_ref, b_ref, bias_ref, o_ref, acc_ref):
    k = pl.program_id(2)

    @pl.when(k == 0)
    def _():
        acc_ref[...] = jnp.zeros_like(acc_ref)

    acc_ref[...] += jnp.dot(a_ref[...], b_ref[...],
                            preferred_element_type=jnp.float32)

    @pl.when(k == pl.num_programs(2) - 1)
    def _():
        o_ref[...] = (acc_ref[...] + bias_ref[...]).astype(o_ref.dtype)


def _matmul_bias(a, b, bias, out_dtype, *, tm=256, tn=256, tk=256):
    """out[M, N] = a[M, K] @ b[K, N] + bias[N], tiled for the MXU."""
    M, K = a.shape
    K2, N = b.shape
    assert K == K2

    # Clamp tiles to the (aligned) problem size; keep 8/128 alignment.
    tm = min(tm, _round_up(M, 8))
    tn = min(tn, _round_up(N, 128))
    tk = min(tk, _round_up(K, 128))
    Mp, Kp, Np = _round_up(M, tm), _round_up(K, tk), _round_up(N, tn)

    if (Mp, Kp) != (M, K):
        a = jnp.pad(a, ((0, Mp - M), (0, Kp - K)))
    if (Kp, Np) != (K, N):
        b = jnp.pad(b, ((0, Kp - K), (0, Np - N)))
    bias2d = jnp.pad(bias.reshape(1, N), ((0, 0), (0, Np - N)))

    grid = (Mp // tm, Np // tn, Kp // tk)
    out = pl.pallas_call(
        _matmul_bias_kernel,
        out_shape=jax.ShapeDtypeStruct((Mp, Np), out_dtype),
        grid=grid,
        in_specs=[
            pl.BlockSpec((tm, tk), lambda i, j, k: (i, k)),
            pl.BlockSpec((tk, tn), lambda i, j, k: (k, j)),
            pl.BlockSpec((1, tn), lambda i, j, k: (0, j)),
        ],
        out_specs=pl.BlockSpec((tm, tn), lambda i, j, k: (i, j)),
        scratch_shapes=[pltpu.VMEM((tm, tn), jnp.float32)],
        compiler_params=pltpu.CompilerParams(
            dimension_semantics=("parallel", "parallel", "arbitrary"),
        ),
    )(a, b, bias2d)
    return out[:M, :N]


def conv2d_static_same_padding(x, weight, bias=None, *, stride=(1, 1)):
    """Forward pass of Conv2dStaticSamePadding.

    x:      (N, CIN, H, W)   NCHW, like PyTorch
    weight: (COUT, CIN, KH, KW)  (OIHW, like nn.Conv2d)
    bias:   (COUT,) or None
    """
    N, CIN, H, W = x.shape
    COUT, CIN_w, KH, KW = weight.shape
    # TODO(synk): groups > 1 not implemented (module default is groups=1).
    assert CIN_w == CIN, "only groups=1 is supported"
    sh, sw = stride

    # TF-SAME padding exactly as in the PyTorch module.
    extra_h = (math.ceil(W / sw) - 1) * sw - W + KW
    extra_v = (math.ceil(H / sh) - 1) * sh - H + KH
    left = extra_h // 2
    right = extra_h - left
    top = extra_v // 2
    bottom = extra_v - top

    # NHWC: channels on the lane axis.
    xh = jnp.transpose(x, (0, 2, 3, 1))
    # F.pad semantics: negative values crop.
    xh = xh[:, max(0, -top): H - max(0, -bottom),
            max(0, -left): W - max(0, -right), :]
    xh = jnp.pad(xh, ((0, 0),
                      (max(0, top), max(0, bottom)),
                      (max(0, left), max(0, right)),
                      (0, 0)))
    Hp, Wp = xh.shape[1], xh.shape[2]
    OH = (Hp - KH) // sh + 1
    OW = (Wp - KW) // sw + 1

    # im2col: one strided slice per kernel tap, concatenated along channels.
    patches = []
    for kh in range(KH):
        for kw in range(KW):
            patches.append(
                lax.slice(
                    xh,
                    (0, kh, kw, 0),
                    (N, kh + (OH - 1) * sh + 1, kw + (OW - 1) * sw + 1, CIN),
                    (1, sh, sw, 1),
                )
            )
    a = jnp.concatenate(patches, axis=-1).reshape(N * OH * OW, KH * KW * CIN)

    # (COUT, CIN, KH, KW) -> (KH*KW*CIN, COUT), matching the patch column order.
    b = jnp.transpose(weight, (2, 3, 1, 0)).reshape(KH * KW * CIN, COUT)
    if bias is None:
        bias = jnp.zeros((COUT,), dtype=x.dtype)

    out = _matmul_bias(a, b, bias, x.dtype)
    out = out.reshape(N, OH, OW, COUT)
    return jnp.transpose(out, (0, 3, 1, 2))  # back to NCHW


def _ref_conv2d_static_same_padding(x, weight, bias, stride):
    N, CIN, H, W = x.shape
    COUT, _, KH, KW = weight.shape
    sh, sw = stride
    extra_h = (math.ceil(W / sw) - 1) * sw - W + KW
    extra_v = (math.ceil(H / sh) - 1) * sh - H + KH
    left = extra_h // 2
    right = extra_h - left
    top = extra_v // 2
    bottom = extra_v - top
    out = lax.conv_general_dilated(
        x, weight, window_strides=(sh, sw),
        padding=((top, bottom), (left, right)),
        dimension_numbers=("NCHW", "OIHW", "NCHW"),
        precision=lax.Precision.HIGHEST)
    if bias is not None:
        out = out + bias.reshape(1, COUT, 1, 1)
    return out


if __name__ == "__main__":
    key = jax.random.PRNGKey(0)
    k1, k2, k3 = jax.random.split(key, 3)

    N, CIN, H, W = 2, 4, 16, 16
    COUT, KH, KW = 8, 3, 3
    x = jax.random.normal(k1, (N, CIN, H, W), dtype=jnp.float32)
    w = jax.random.normal(k2, (COUT, CIN, KH, KW), dtype=jnp.float32) * 0.1
    b = jax.random.normal(k3, (COUT,), dtype=jnp.float32)

    # stride 1 (symmetric SAME pad) and stride 2 (asymmetric SAME pad).
    for stride in [(1, 1), (2, 2)]:
        y = conv2d_static_same_padding(x, w, b, stride=stride)
        jax.block_until_ready(y)
        y_ref = _ref_conv2d_static_same_padding(x, w, b, stride)
        assert y.shape == y_ref.shape and y.dtype == y_ref.dtype
        assert jnp.allclose(y, y_ref, atol=1e-3, rtol=1e-3), (
            stride, float(jnp.max(jnp.abs(y - y_ref))))

    print("KERNEL_OK")
</pallas_src>

<mosaic_0001>
module attributes {stable_mosaic.version = 11 : i64} {
  func.func @_matmul_bias_kernel(%arg0: i32, %arg1: i32, %arg2: i32, %arg3: memref<256x128xf32, #tpu.memory_space<vmem>>, %arg4: memref<128x128xf32, #tpu.memory_space<vmem>>, %arg5: memref<1x128xf32, #tpu.memory_space<vmem>>, %arg6: memref<256x128xf32, #tpu.memory_space<vmem>>, %arg7: memref<256x128xf32, #tpu.memory_space<vmem>>) attributes {dimension_semantics = [#tpu.dimension_semantics<parallel>, #tpu.dimension_semantics<parallel>, #tpu.dimension_semantics<arbitrary>], iteration_bounds = array<i64: 2, 1, 1>, scalar_prefetch = 0 : i64, scratch_operands = 1 : i64, tpu.core_type = #tpu.core_type<tc>, window_params = [{transform_indices = @transform_0, window_bounds = array<i64: 256, 128>}, {transform_indices = @transform_1, window_bounds = array<i64: 128, 128>}, {transform_indices = @transform_2, window_bounds = array<i64: 1, 128>}, {transform_indices = @transform_3, window_bounds = array<i64: 256, 128>}]} {
    %c0_i32 = arith.constant 0 : i32
    %0 = arith.cmpi eq, %arg2, %c0_i32 : i32
    %1 = arith.extui %0 : i1 to i32
    %c0_i32_0 = arith.constant 0 : i32
    %2 = arith.cmpi ne, %1, %c0_i32_0 : i32
    scf.if %2 {
      %cst_10 = arith.constant 0.000000e+00 : f32
      %12 = vector.broadcast %cst_10 : f32 to vector<256x128xf32>
      %c0_11 = arith.constant 0 : index
      %c0_12 = arith.constant 0 : index
      %13 = vector.load %arg7[%c0_11, %c0_12] : memref<256x128xf32, #tpu.memory_space<vmem>>, vector<256x128xf32>
      tpu.vector_store %arg7[%c0_11, %c0_12], %12 {strides = array<i32>} : memref<256x128xf32, #tpu.memory_space<vmem>>, vector<256x128xf32>,
    } else {
    }
    %c0 = arith.constant 0 : index
    %c0_1 = arith.constant 0 : index
    %3 = vector.load %arg7[%c0, %c0_1] : memref<256x128xf32, #tpu.memory_space<vmem>>, vector<256x128xf32>
    %c0_2 = arith.constant 0 : index
    %c0_3 = arith.constant 0 : index
    %4 = vector.load %arg3[%c0_2, %c0_3] : memref<256x128xf32, #tpu.memory_space<vmem>>, vector<256x128xf32>
    %c0_4 = arith.constant 0 : index
    %c0_5 = arith.constant 0 : index
    %5 = vector.load %arg4[%c0_4, %c0_5] : memref<128x128xf32, #tpu.memory_space<vmem>>, vector<128x128xf32>
    %cst = arith.constant dense<0.000000e+00> : vector<256x128xf32>
    %6 = tpu.matmul %4, %5, %cst {dimension_numbers = #tpu.dot_dimension_numbers<[1], [0], [0], [1], [0, 0, 1, 1], [], []>} : vector<256x128xf32>, vector<128x128xf32>, vector<256x128xf32> -> vector<256x128xf32>
    %7 = arith.addf %3, %6 : vector<256x128xf32>
    %c0_6 = arith.constant 0 : index
    %c0_7 = arith.constant 0 : index
    %8 = vector.load %arg7[%c0_6, %c0_7] : memref<256x128xf32, #tpu.memory_space<vmem>>, vector<256x128xf32>
    tpu.vector_store %arg7[%c0_6, %c0_7], %7 {strides = array<i32>} : memref<256x128xf32, #tpu.memory_space<vmem>>, vector<256x128xf32>,
    %c0_i32_8 = arith.constant 0 : i32
    %9 = arith.cmpi eq, %arg2, %c0_i32_8 : i32
    %10 = arith.extui %9 : i1 to i32
    %c0_i32_9 = arith.constant 0 : i32
    %11 = arith.cmpi ne, %10, %c0_i32_9 : i32
    scf.if %11 {
      %c0_10 = arith.constant 0 : index
      %c0_11 = arith.constant 0 : index
      %12 = vector.load %arg7[%c0_10, %c0_11] : memref<256x128xf32, #tpu.memory_space<vmem>>, vector<256x128xf32>
      %c0_12 = arith.constant 0 : index
      %c0_13 = arith.constant 0 : index
      %13 = vector.load %arg5[%c0_12, %c0_13] : memref<1x128xf32, #tpu.memory_space<vmem>>, vector<1x128xf32>
      %14 = vector.broadcast %13 : vector<1x128xf32> to vector<256x128xf32>
      %15 = arith.addf %12, %14 : vector<256x128xf32>
      %c0_14 = arith.constant 0 : index
      %c0_15 = arith.constant 0 : index
      %16 = vector.load %arg6[%c0_14, %c0_15] : memref<256x128xf32, #tpu.memory_space<vmem>>, vector<256x128xf32>
      tpu.vector_store %arg6[%c0_14, %c0_15], %15 {strides = array<i32>} : memref<256x128xf32, #tpu.memory_space<vmem>>, vector<256x128xf32>,
    } else {
    }
    return
  }
  func.func @transform_0(%arg0: i32, %arg1: i32, %arg2: i32) -> (i32, i32) {
    %c0_i32 = arith.constant 0 : i32
    return %arg0, %arg2 : i32, i32
  }
  func.func @transform_1(%arg0: i32, %arg1: i32, %arg2: i32) -> (i32, i32) {
    %c0_i32 = arith.constant 0 : i32
    return %arg2, %arg1 : i32, i32
  }
  func.func @transform_2(%arg0: i32, %arg1: i32, %arg2: i32) -> (i32, i32) {
    %c0_i32 = arith.constant 0 : i32
    %c0_i32_0 = arith.constant 0 : i32
    return %c0_i32, %arg1 : i32, i32
  }
  func.func @transform_3(%arg0: i32, %arg1: i32, %arg2: i32) -> (i32, i32) {
    %c0_i32 = arith.constant 0 : i32
    return %arg0, %arg1 : i32, i32
  }
}

</mosaic_0001>

<llo_original>
// kernel: tpu_custom_call.1
$region0: #{tpu_custom_call.1}
  #allocation0 [shape = 'u32[]', space=smem, size = 0x4, offset = 0x4, fixed_abs, tag = 'smem constant byte address 0x4 - core index']
  #allocation1 [shape = 'u32[144,128]{1,0:T(1,128)}', space=vmem, size = 0x12000, scoped, tag = 'internal scratch']
  #allocation2 [shape = 'f32[256,128]{1,0:T(8,128)}', space=vmem, size = 0x20000, scoped, tag = 'scratch operand']
  %s0 = inlined_call_operand.hbm [shape: f32[512,128], index: 0, kind: input, shape index: {}]
  %s1 = inlined_call_operand.hbm [shape: f32[128,128], index: 1, kind: input, shape index: {}]
  %s2 = inlined_call_operand.vmem [shape: f32[1,128], index: 2, kind: input, shape index: {}]
  %s3 = inlined_call_operand.hbm [shape: f32[512,128], index: 3, kind: output, shape index: {}]
  %s4 = sld [smem:[#allocation0]]
  $region61: #{tpu_custom_call.1} parent=0
    _
  %s6 = ssub.s32 1, %s4
  %s7 = scalar_select 0, %s6, %s4
  $region1: #{tpu_custom_call.1} parent=0
    #allocation3 [shape = 'u8[262144]{0}', space=vmem, size = 0x40000, scoped, tag = 'input window, operand 0']
    #allocation4 [shape = 's32[2]{0}', space=sflag, size = 0x8, scoped, tag = 'scoped memory for tpu_custom_call.1']
    #allocation5 [shape = 's32[2]{0}', space=sflag, size = 0x8, scoped, tag = 'scoped memory for tpu_custom_call.1']
    #allocation6 [shape = 'u8[65536]{0}', space=vmem, size = 0x10000, scoped, tag = 'input window, operand 1, single buffered']
    #allocation7 [shape = 's32[1]{0}', space=sflag, size = 0x4, scoped, tag = 'scoped memory for tpu_custom_call.1']
    #allocation8 [shape = 'u8[262144]{0}', space=vmem, size = 0x40000, scoped, tag = 'output window, operand 0']
    %8 = vsyncpa [#allocation4], 0
    %s9 = scalar_lea.sflag [#allocation4], 1
    %10 = vsyncpa %s9, 0
    %11 = vsyncpa [#allocation7], 0
    %12 = vsyncpa [#allocation5], 0
    %s13 = scalar_lea.sflag [#allocation5], 1
    %14 = vsyncpa %s13, 0
    loop: start=0, step=1, limit=4
    $region2: #{tpu_custom_call.1} parent=1 // loop_pre_header
      _
    $region3: #{tpu_custom_call.1} parent=1 // loop_header
      %s16 = sphi 0, %s20
      %p17 = scmp.ge.s32.totalorder %s16, 4
      %s23 = sphi 0, %s42
      %s24 = sphi 0, %s38
      %s25 = sphi 0, %s34
      %s26 = sphi 0, %s23
      %s27 = sphi 0, %s24
      %s28 = sphi 0, %s25
      %s29 = sphi 0, %s26
      %s30 = sphi 0, %s27
      %s31 = sphi 0, %s28
      %s47 = sphi 0, %s49
      %s50 = sphi 0, %s47
      %s51 = sphi 0, %s50
      %s67 = sphi 0, %s51
      %s75 = sphi 0, %s77
      %s78 = sphi 0, %s75
      %s79 = sphi 0, %s78
      %s95 = sphi 0, %s79
      %s101 = sphi 0, %s103
      %s104 = sphi 0, %s101
      %s105 = sphi 0, %s104
      %s121 = sphi 0, %s105
      %s129 = sphi 0, %s131
      %s132 = sphi 0, %s129
      %s133 = sphi 0, %s132
      %s149 = sphi 0, %s133
    $region4: #{tpu_custom_call.1} parent=1 // loop_header_branch
      %19 = sbr.rel (%p17) target = $region8
    $region5: #{tpu_custom_call.1} parent=1 // loop_body
      %s21 = ssub.s32 %s16, 1
      %s22 = ssub.s32 %s16, 2
      %s32 = sadd.s32 1, %s25
      %p33 = scmp.ge.s32.totalorder %s32, 1
      %s34 = scalar_select %p33, 0, %s32
      %s35 = sadd.s32 1, %s24
      %s36 = scalar_select %p33, %s35, %s24
      %p37 = scmp.ge.s32.totalorder %s36, 1
      %s38 = scalar_select %p37, 0, %s36
      %s39 = sadd.s32 1, %s23
      %s40 = scalar_select %p37, %s39, %s23
      %p41 = scmp.ge.s32.totalorder %s40, 2
      %s42 = scalar_select %p41, 0, %s40
      %s43 = ssub.s32 %s23, %s42
      %s44 = ssub.s32 %s25, %s34
      %s45 = sor.u32 %s43, %s44
      %p46 = scmp.eq.s32.totalorder %s45, 0
      %s48 = sadd.s32 %s47, 1
      %s49 = scalar_select %p46, %s47, %s48
      %p52 = pneg %p46
      %p53 = scmp.eq.s32.totalorder %s16, 1
      %p54 = por %p52, %p53
      %p55 = scmp.ne.s32.totalorder %s47, %s50
      %p56 = scmp.eq.s32.totalorder %s16, 0
      %p57 = por %p55, %p56
      %p58 = scmp.ne.s32.totalorder %s47, %s50
      %p59 = scmp.eq.s32.totalorder %s21, 1
      %p60 = por %p58, %p59
      %p61 = scmp.ne.s32.totalorder %s50, %s51
      %p62 = scmp.eq.s32.totalorder %s21, 0
      %p63 = por %p61, %p62
      %p64 = scmp.ne.s32.totalorder %s50, %s51
      %p65 = scmp.eq.s32.totalorder %s22, 1
      %p66 = por %p64, %p65
      %p68 = scmp.ne.s32.totalorder %s51, %s67
      %p69 = scmp.eq.s32.totalorder %s22, 0
      %p70 = por %p68, %p69
      %s71 = ssub.s32 %s25, %s34
      %s72 = ssub.s32 %s24, %s38
      %s73 = sor.u32 %s71, %s72
      %p74 = scmp.eq.s32.totalorder %s73, 0
      %s76 = sadd.s32 %s75, 1
      %s77 = scalar_select %p74, %s75, %s76
      %p80 = pneg %p74
      %p81 = scmp.eq.s32.totalorder %s16, 1
      %p82 = por %p80, %p81
      %p83 = scmp.ne.s32.totalorder %s75, %s78
      %p84 = scmp.eq.s32.totalorder %s16, 0
      %p85 = por %p83, %p84
      %p86 = scmp.ne.s32.totalorder %s75, %s78
      %p87 = scmp.eq.s32.totalorder %s21, 1
      %p88 = por %p86, %p87
      %p89 = scmp.ne.s32.totalorder %s78, %s79
      %p90 = scmp.eq.s32.totalorder %s21, 0
      %p91 = por %p89, %p90
      %p92 = scmp.ne.s32.totalorder %s78, %s79
      %p93 = scmp.eq.s32.totalorder %s22, 1
      %p94 = por %p92, %p93
      %p96 = scmp.ne.s32.totalorder %s79, %s95
      %p97 = scmp.eq.s32.totalorder %s22, 0
      %p98 = por %p96, %p97
      %s99 = ssub.s32 %s24, %s38
      %p100 = scmp.eq.s32.totalorder %s99, 0
      %s102 = sadd.s32 %s101, 1
      %s103 = scalar_select %p100, %s101, %s102
      %p106 = pneg %p100
      %p107 = scmp.eq.s32.totalorder %s16, 1
      %p108 = por %p106, %p107
      %p109 = scmp.ne.s32.totalorder %s101, %s104
      %p110 = scmp.eq.s32.totalorder %s16, 0
      %p111 = por %p109, %p110
      %p112 = scmp.ne.s32.totalorder %s101, %s104
      %p113 = scmp.eq.s32.totalorder %s21, 1
      %p114 = por %p112, %p113
      %p115 = scmp.ne.s32.totalorder %s104, %s105
      %p116 = scmp.eq.s32.totalorder %s21, 0
      %p117 = por %p115, %p116
      %p118 = scmp.ne.s32.totalorder %s104, %s105
      %p119 = scmp.eq.s32.totalorder %s22, 1
      %p120 = por %p118, %p119
      %p122 = scmp.ne.s32.totalorder %s105, %s121
      %p123 = scmp.eq.s32.totalorder %s22, 0
      %p124 = por %p122, %p123
      %s125 = ssub.s32 %s23, %s42
      %s126 = ssub.s32 %s24, %s38
      %s127 = sor.u32 %s125, %s126
      %p128 = scmp.eq.s32.totalorder %s127, 0
      %s130 = sadd.s32 %s129, 1
      %s131 = scalar_select %p128, %s129, %s130
      %p134 = pneg %p128
      %p135 = scmp.eq.s32.totalorder %s16, 1
      %p136 = por %p134, %p135
      %p137 = scmp.ne.s32.totalorder %s129, %s132
      %p138 = scmp.eq.s32.totalorder %s16, 0
      %p139 = por %p137, %p138
      %p140 = scmp.ne.s32.totalorder %s129, %s132
      %p141 = scmp.eq.s32.totalorder %s21, 1
      %p142 = por %p140, %p141
      %p143 = scmp.ne.s32.totalorder %s132, %s133
      %p144 = scmp.eq.s32.totalorder %s21, 0
      %p145 = por %p143, %p144
      %p146 = scmp.ne.s32.totalorder %s132, %s133
      %p147 = scmp.eq.s32.totalorder %s22, 1
      %p148 = por %p146, %p147
      %p150 = scmp.ne.s32.totalorder %s133, %s149
      %p151 = scmp.eq.s32.totalorder %s22, 0
      %p152 = por %p150, %p151
      %p153 = scmp.le.s32.totalorder 1, %s16
      %p154 = scmp.lt.s32.totalorder %s16, 3
      %p155 = pnand %p153, %p154
      %p156 = pneg %p155
      // Predicated region
      $region9: #{tpu_custom_call.1} parent=5 // pred_check
        _
      $region10: #{tpu_custom_call.1} parent=5 // pred_check_branch
        %158 = sbr.rel (%p155) target = $region12
      $region11: #{tpu_custom_call.1} parent=5 // pred_region
        %s159 = ssub.s32 %s16, 1
        // Predicated region
        $region13: #{tpu_custom_call.1} parent=11 // pred_check
          %p160 = pneg %p91
        $region14: #{tpu_custom_call.1} parent=11 // pred_check_branch
          %162 = sbr.rel (%p160) target = $region16
        $region15: #{tpu_custom_call.1} parent=11 // pred_region
          %s163 = smul.u32 16, %s28
          %s165 = ssub.s32 2048, 2048
          %166 = vsyncadd [#allocation7], %s165
          %s167 = sadd.s32 %s27, %s163
          %s168 = smul.addr %s167, 128
          %s169 = scalar_lea.hbm %s1, %s168
          %s170 = sshll.u32 [#allocation6], 4
          %s171 = int_to_ptr.vmem [resolvable:$true] %s170
          %176 = dma.hbm_to_vmem [thread:$0]  %s169, 2048, %s171, [#allocation7], 128, 128, 8
        $region16: #{tpu_custom_call.1} parent=11 // pred_fallthru
          _
        // Predicated region
        $region17: #{tpu_custom_call.1} parent=11 // pred_check
          %p177 = pneg %p117
        $region18: #{tpu_custom_call.1} parent=11 // pred_check_branch
          %179 = sbr.rel (%p177) target = $region20
        $region19: #{tpu_custom_call.1} parent=11 // pred_region
          %p180 = scmp.lt.s32.totalorder %s27, 0
          %s181 = scalar_select %p180, %s27, 0
          %s182 = scalar_lea.vmem %s2, %s181
        $region20: #{tpu_custom_call.1} parent=11 // pred_fallthru
          _
      $region12: #{tpu_custom_call.1} parent=5 // pred_fallthru
        _
      %p183 = scmp.lt.s32.totalorder %s16, 2
      // Predicated region
      $region21: #{tpu_custom_call.1} parent=5 // pred_check
        %p184 = pneg %p183
      $region22: #{tpu_custom_call.1} parent=5 // pred_check_branch
        %186 = sbr.rel (%p184) target = $region24
      $region23: #{tpu_custom_call.1} parent=5 // pred_region
        // Predicated region
        $region25: #{tpu_custom_call.1} parent=23 // pred_check
          %p187 = pneg %p57
        $region26: #{tpu_custom_call.1} parent=23 // pred_check_branch
          %189 = sbr.rel (%p187) target = $region28
        $region27: #{tpu_custom_call.1} parent=23 // pred_region
          %s190 = sand.u32 %s47, 1
          %s191 = scalar_lea.sflag [#allocation4], %s190
          %s192 = sand.u32 %s47, 1
          %s193 = smul.addr %s192, 256
          %s194 = scalar_lea.vmem [#allocation3], %s193
          %s195 = smul.u32 32, %s23
          %s197 = ssub.s32 4096, 4096
          %198 = vsyncadd %s191, %s197
          %s199 = sadd.s32 %s25, %s195
          %s200 = smul.addr %s199, 128
          %s201 = scalar_lea.hbm %s0, %s200
          %s202 = sshll.u32 %s194, 4
          %s203 = int_to_ptr.vmem [resolvable:$true] %s202
          %208 = dma.hbm_to_vmem [thread:$0]  %s201, 4096, %s203, %s191, 128, 128, 8
        $region28: #{tpu_custom_call.1} parent=23 // pred_fallthru
          _
      $region24: #{tpu_custom_call.1} parent=5 // pred_fallthru
        _
      %p209 = scmp.le.s32.totalorder 1, %s16
      %p210 = scmp.lt.s32.totalorder %s16, 3
      %p211 = pnand %p209, %p210
      %p212 = pneg %p211
      // Predicated region
      $region29: #{tpu_custom_call.1} parent=5 // pred_check
        _
      $region30: #{tpu_custom_call.1} parent=5 // pred_check_branch
        %214 = sbr.rel (%p211) target = $region32
      $region31: #{tpu_custom_call.1} parent=5 // pred_region
        %s215 = ssub.s32 %s16, 1
        %s216 = sand.u32 %s50, 1
        %s217 = scalar_lea.sflag [#allocation4], %s216
        %s218 = sand.u32 %s50, 1
        %s219 = smul.addr %s218, 256
        %s220 = scalar_lea.vmem [#allocation3], %s219
        // Predicated region
        $region33: #{tpu_custom_call.1} parent=31 // pred_check
          %p221 = pneg %p63
        $region34: #{tpu_custom_call.1} parent=31 // pred_check_branch
          %223 = sbr.rel (%p221) target = $region36
        $region35: #{tpu_custom_call.1} parent=31 // pred_region
          %224 = dma.done %s217, 4096
        $region36: #{tpu_custom_call.1} parent=31 // pred_fallthru
          _
        // Predicated region
        $region37: #{tpu_custom_call.1} parent=31 // pred_check
          %p225 = pneg %p91
        $region38: #{tpu_custom_call.1} parent=31 // pred_check_branch
          %227 = sbr.rel (%p225) target = $region40
        $region39: #{tpu_custom_call.1} parent=31 // pred_region
          %228 = dma.done [#allocation7], 2048
        $region40: #{tpu_custom_call.1} parent=31 // pred_fallthru
          _
        %s229 = sand.u32 %s50, 1
        %s230 = scalar_lea.sflag [#allocation4], %s229
        %s231 = sand.u32 %s50, 1
        %s232 = smul.addr %s231, 256
        %s233 = scalar_lea.vmem [#allocation3], %s232
        %p234 = pneg %p63
        %p235 = pneg %p60
        %p236 = pneg %p91
        %p237 = pneg %p88
        %p238 = scmp.lt.s32.totalorder %s27, 0
        %s239 = scalar_select %p238, %s27, 0
        %s240 = scalar_lea.vmem %s2, %s239
        %p241 = pneg %p117
        %p242 = pneg %p114
        %p243 = pneg %p145
        %p244 = pneg %p142
        %s245 = sand.u32 %s132, 1
        %s246 = scalar_lea.sflag [#allocation5], %s245
        %s247 = sand.u32 %s132, 1
        %s248 = smul.addr %s247, 256
        %s249 = scalar_lea.vmem [#allocation8], %s248
        %s250 = smul.u32 32, %s26
        %s251 = smul.u32 16, %s28
        %p252 = scmp.lt.s32.totalorder %s27, 0
        %s253 = scalar_select %p252, %s27, 0
        %s254 = scalar_lea.vmem %s2, %s253
        %s255 = smul.u32 32, %s26
        %p256 = scmp.eq.s32.totalorder %s28, 0
        // Predicated region
        $region41: #{tpu_custom_call.1} parent=31 // pred_check
          %p257 = pneg %p256
        $region42: #{tpu_custom_call.1} parent=31 // pred_check_branch
          %259 = sbr.rel (%p257) target = $region44
        $region43: #{tpu_custom_call.1} parent=31 // pred_region
          %260 = vst [vmem:[#allocation2] sm:$0xff] 0.0
          %261 = vst [vmem:[#allocation2 + $0x8] sm:$0xff] 0.0
          %262 = vst [vmem:[#allocation2 + $0x10] sm:$0xff] 0.0
          %263 = vst [vmem:[#allocation2 + $0x18] sm:$0xff] 0.0
          %264 = vst [vmem:[#allocation2 + $0x20] sm:$0xff] 0.0
          %265 = vst [vmem:[#allocation2 + $0x28] sm:$0xff] 0.0
          %266 = vst [vmem:[#allocation2 + $0x30] sm:$0xff] 0.0
          %267 = vst [vmem:[#allocation2 + $0x38] sm:$0xff] 0.0
          %268 = vst [vmem:[#allocation2 + $0x40] sm:$0xff] 0.0
          %269 = vst [vmem:[#allocation2 + $0x48] sm:$0xff] 0.0
          %270 = vst [vmem:[#allocation2 + $0x50] sm:$0xff] 0.0
          %271 = vst [vmem:[#allocation2 + $0x58] sm:$0xff] 0.0
          %272 = vst [vmem:[#allocation2 + $0x60] sm:$0xff] 0.0
          %273 = vst [vmem:[#allocation2 + $0x68] sm:$0xff] 0.0
          %274 = vst [vmem:[#allocation2 + $0x70] sm:$0xff] 0.0
          %275 = vst [vmem:[#allocation2 + $0x78] sm:$0xff] 0.0
          %276 = vst [vmem:[#allocation2 + $0x80] sm:$0xff] 0.0
          %277 = vst [vmem:[#allocation2 + $0x88] sm:$0xff] 0.0
          %278 = vst [vmem:[#allocation2 + $0x90] sm:$0xff] 0.0
          %279 = vst [vmem:[#allocation2 + $0x98] sm:$0xff] 0.0
          %280 = vst [vmem:[#allocation2 + $0xa0] sm:$0xff] 0.0
          %281 = vst [vmem:[#allocation2 + $0xa8] sm:$0xff] 0.0
          %282 = vst [vmem:[#allocation2 + $0xb0] sm:$0xff] 0.0
          %283 = vst [vmem:[#allocation2 + $0xb8] sm:$0xff] 0.0
          %284 = vst [vmem:[#allocation2 + $0xc0] sm:$0xff] 0.0
          %285 = vst [vmem:[#allocation2 + $0xc8] sm:$0xff] 0.0
          %286 = vst [vmem:[#allocation2 + $0xd0] sm:$0xff] 0.0
          %287 = vst [vmem:[#allocation2 + $0xd8] sm:$0xff] 0.0
          %288 = vst [vmem:[#allocation2 + $0xe0] sm:$0xff] 0.0
          %289 = vst [vmem:[#allocation2 + $0xe8] sm:$0xff] 0.0
          %290 = vst [vmem:[#allocation2 + $0xf0] sm:$0xff] 0.0
          %291 = vst [vmem:[#allocation2 + $0xf8] sm:$0xff] 0.0
        $region44: #{tpu_custom_call.1} parent=31 // pred_fallthru
          _
        %v292 = vld [vmem:[#allocation2] sm:$0xff]
        %v293 = vld [vmem:[#allocation2 + $0x8] sm:$0xff]
        %v294 = vld [vmem:[#allocation2 + $0x10] sm:$0xff]
        %v295 = vld [vmem:[#allocation2 + $0x18] sm:$0xff]
        %v296 = vld [vmem:[#allocation2 + $0x20] sm:$0xff]
        %v297 = vld [vmem:[#allocation2 + $0x28] sm:$0xff]
        %v298 = vld [vmem:[#allocation2 + $0x30] sm:$0xff]
        %v299 = vld [vmem:[#allocation2 + $0x38] sm:$0xff]
        %v300 = vld [vmem:[#allocation2 + $0x40] sm:$0xff]
        %v301 = vld [vmem:[#allocation2 + $0x48] sm:$0xff]
        %v302 = vld [vmem:[#allocation2 + $0x50] sm:$0xff]
        %v303 = vld [vmem:[#allocation2 + $0x58] sm:$0xff]
        %v304 = vld [vmem:[#allocation2 + $0x60] sm:$0xff]
        %v305 = vld [vmem:[#allocation2 + $0x68] sm:$0xff]
        %v306 = vld [vmem:[#allocation2 + $0x70] sm:$0xff]
        %v307 = vld [vmem:[#allocation2 + $0x78] sm:$0xff]
        %v308 = vld [vmem:[#allocation2 + $0x80] sm:$0xff]
        %v309 = vld [vmem:[#allocation2 + $0x88] sm:$0xff]
        %v310 = vld [vmem:[#allocation2 + $0x90] sm:$0xff]
        %v311 = vld [vmem:[#allocation2 + $0x98] sm:$0xff]
        %v312 = vld [vmem:[#allocation2 + $0xa0] sm:$0xff]
        %v313 = vld [vmem:[#allocation2 + $0xa8] sm:$0xff]
        %v314 = vld [vmem:[#allocation2 + $0xb0] sm:$0xff]
        %v315 = vld [vmem:[#allocation2 + $0xb8] sm:$0xff]
        %v316 = vld [vmem:[#allocation2 + $0xc0] sm:$0xff]
        %v317 = vld [vmem:[#allocation2 + $0xc8] sm:$0xff]
        %v318 = vld [vmem:[#allocation2 + $0xd0] sm:$0xff]
        %v319 = vld [vmem:[#allocation2 + $0xd8] sm:$0xff]
        %v320 = vld [vmem:[#allocation2 + $0xe0] sm:$0xff]
        %v321 = vld [vmem:[#allocation2 + $0xe8] sm:$0xff]
        %v322 = vld [vmem:[#allocation2 + $0xf0] sm:$0xff]
        %v323 = vld [vmem:[#allocation2 + $0xf8] sm:$0xff]
        %v324 = vld [vmem:[%s220] sm:$0xff]
        %v325 = vld [vmem:[%s220 + $0x8] sm:$0xff]
        %v326 = vld [vmem:[%s220 + $0x10] sm:$0xff]
        %v327 = vld [vmem:[%s220 + $0x18] sm:$0xff]
        %v328 = vld [vmem:[%s220 + $0x20] sm:$0xff]
        %v329 = vld [vmem:[%s220 + $0x28] sm:$0xff]
        %v330 = vld [vmem:[%s220 + $0x30] sm:$0xff]
        %v331 = vld [vmem:[%s220 + $0x38] sm:$0xff]
        %v332 = vld [vmem:[%s220 + $0x40] sm:$0xff]
        %v333 = vld [vmem:[%s220 + $0x48] sm:$0xff]
        %v334 = vld [vmem:[%s220 + $0x50] sm:$0xff]
        %v335 = vld [vmem:[%s220 + $0x58] sm:$0xff]
        %v336 = vld [vmem:[%s220 + $0x60] sm:$0xff]
        %v337 = vld [vmem:[%s220 + $0x68] sm:$0xff]
        %v338 = vld [vmem:[%s220 + $0x70] sm:$0xff]
        %v339 = vld [vmem:[%s220 + $0x78] sm:$0xff]
        %v340 = vld [vmem:[%s220 + $0x80] sm:$0xff]
        %v341 = vld [vmem:[%s220 + $0x88] sm:$0xff]
        %v342 = vld [vmem:[%s220 + $0x90] sm:$0xff]
        %v343 = vld [vmem:[%s220 + $0x98] sm:$0xff]
        %v344 = vld [vmem:[%s220 + $0xa0] sm:$0xff]
        %v345 = vld [vmem:[%s220 + $0xa8] sm:$0xff]
        %v346 = vld [vmem:[%s220 + $0xb0] sm:$0xff]
        %v347 = vld [vmem:[%s220 + $0xb8] sm:$0xff]
        %v348 = vld [vmem:[%s220 + $0xc0] sm:$0xff]
        %v349 = vld [vmem:[%s220 + $0xc8] sm:$0xff]
        %v350 = vld [vmem:[%s220 + $0xd0] sm:$0xff]
        %v351 = vld [vmem:[%s220 + $0xd8] sm:$0xff]
        %v352 = vld [vmem:[%s220 + $0xe0] sm:$0xff]
        %v353 = vld [vmem:[%s220 + $0xe8] sm:$0xff]
        %v354 = vld [vmem:[%s220 + $0xf0] sm:$0xff]
        %v355 = vld [vmem:[%s220 + $0xf8] sm:$0xff]
        %v356 = vld [vmem:[#allocation6] sm:$0xff]
        %v357 = vld [vmem:[#allocation6 + $0x8] sm:$0xff]
        %v358 = vld [vmem:[#allocation6 + $0x10] sm:$0xff]
        %v359 = vld [vmem:[#allocation6 + $0x18] sm:$0xff]
        %v360 = vld [vmem:[#allocation6 + $0x20] sm:$0xff]
        %v361 = vld [vmem:[#allocation6 + $0x28] sm:$0xff]
        %v362 = vld [vmem:[#allocation6 + $0x30] sm:$0xff]
        %v363 = vld [vmem:[#allocation6 + $0x38] sm:$0xff]
        %v364 = vld [vmem:[#allocation6 + $0x40] sm:$0xff]
        %v365 = vld [vmem:[#allocation6 + $0x48] sm:$0xff]
        %v366 = vld [vmem:[#allocation6 + $0x50] sm:$0xff]
        %v367 = vld [vmem:[#allocation6 + $0x58] sm:$0xff]
        %v368 = vld [vmem:[#allocation6 + $0x60] sm:$0xff]
        %v369 = vld [vmem:[#allocation6 + $0x68] sm:$0xff]
        %v370 = vld [vmem:[#allocation6 + $0x70] sm:$0xff]
        %v371 = vld [vmem:[#allocation6 + $0x78] sm:$0xff]
        %372 = vmatprep.subr.mxu0 0.0
        %373 = vmatpush1.msra.mxu0 %v356
        %374 = vmatprep.subr.mxu0 0.0
        %375 = vmatpush1.msra.mxu0 %v357
        %376 = vmatprep.subr.mxu0 0.0
        %377 = vmatpush1.msra.mxu0 %v358
        %378 = vmatprep.subr.mxu0 0.0
        %379 = vmatpush1.msra.mxu0 %v359
        %380 = vmatprep.subr.mxu0 0.0
        %381 = vmatpush1.msra.mxu0 %v360
        %382 = vmatprep.subr.mxu0 0.0
        %383 = vmatpush1.msra.mxu0 %v361
        %384 = vmatprep.subr.mxu0 0.0
        %385 = vmatpush1.msra.mxu0 %v362
        %386 = vmatprep.subr.mxu0 0.0
        %387 = vmatpush1.msra.mxu0 %v363
        %388 = vmatprep.subr.mxu0 0.0
        %389 = vmatpush1.msra.mxu0 %v364
        %390 = vmatprep.subr.mxu0 0.0
        %391 = vmatpush1.msra.mxu0 %v365
        %392 = vmatprep.subr.mxu0 0.0
        %393 = vmatpush1.msra.mxu0 %v366
        %394 = vmatprep.subr.mxu0 0.0
        %395 = vmatpush1.msra.mxu0 %v367
        %396 = vmatprep.subr.mxu0 0.0
        %397 = vmatpush1.msra.mxu0 %v368
        %398 = vmatprep.subr.mxu0 0.0
        %399 = vmatpush1.msra.mxu0 %v369
        %400 = vmatprep.subr.mxu0 0.0
        %401 = vmatpush1.msra.mxu0 %v370
        %402 = vmatprep.subr.mxu0 0.0
        %403 = vmatpush1.msra.mxu0 %v371
        %404 = vmatprep.subr.mxu0 0.0
        %405 = vmatpush1.msra.mxu0 0.0
        %406 = vmatprep.subr.mxu0 0.0
        %407 = vmatpush1.msra.mxu0 0.0
        %408 = vmatprep.subr.mxu0 0.0
        %409 = vmatpush1.msra.mxu0 0.0
        %410 = vmatprep.subr.mxu0 0.0
        %411 = vmatpush1.msra.mxu0 0.0
        %412 = vmatprep.subr.mxu0 0.0
        %413 = vmatpush1.msra.mxu0 0.0
        %414 = vmatprep.subr.mxu0 0.0
        %415 = vmatpush1.msra.mxu0 0.0
        %416 = vmatprep.subr.mxu0 0.0
        %417 = vmatpush1.msra.mxu0 0.0
        %418 = vmatprep.subr.mxu0 0.0
        %419 = vmatpush1.msra.mxu0 0.0
        %420 = vmatprep.subr.mxu0 0.0
        %421 = vmatpush1.msra.mxu0 0.0
        %422 = vmatprep.subr.mxu0 0.0
        %423 = vmatpush1.msra.mxu0 0.0
        %424 = vmatprep.subr.mxu0 0.0
        %425 = vmatpush1.msra.mxu0 0.0
        %426 = vmatprep.subr.mxu0 0.0
        %427 = vmatpush1.msra.mxu0 0.0
        %428 = vmatprep.subr.mxu0 0.0
        %429 = vmatpush1.msra.mxu0 0.0
        %430 = vmatprep.subr.mxu0 0.0
        %431 = vmatpush1.msra.mxu0 0.0
        %432 = vmatprep.subr.mxu0 0.0
        %433 = vmatpush1.msra.mxu0 0.0
        %434 = vmatprep.subr.mxu0 0.0
        %435 = vmatpush1.msra.mxu0 0.0
        %436 = vmatprep.mubr.f32.mxu0 0.0
        %437 = vmatmul.mubr.f32.gmra.mrb[0].mxu0 %v324
        %v438 = vpop.f32.mrb[0].mxu0
        %v439 = vadd.f32 0.0, %v438
        %v440 = vpop.f32.mrb[0].mxu0
        %441 = vmatprep.mubr.f32.mxu0 0.0
        %442 = vmatmul.mubr.f32.gmra.mrb[0].mxu0 %v325
        %v443 = vpop.f32.mrb[0].mxu0
        %v444 = vadd.f32 0.0, %v443
        %v445 = vpop.f32.mrb[0].mxu0
        %446 = vmatprep.mubr.f32.mxu0 0.0
        %447 = vmatmul.mubr.f32.gmra.mrb[0].mxu0 %v326
        %v448 = vpop.f32.mrb[0].mxu0
        %v449 = vadd.f32 0.0, %v448
        %v450 = vpop.f32.mrb[0].mxu0
        %451 = vmatprep.mubr.f32.mxu0 0.0
        %452 = vmatmul.mubr.f32.gmra.mrb[0].mxu0 %v327
        %v453 = vpop.f32.mrb[0].mxu0
        %v454 = vadd.f32 0.0, %v453
        %v455 = vpop.f32.mrb[0].mxu0
        %456 = vmatprep.mubr.f32.mxu0 0.0
        %457 = vmatmul.mubr.f32.gmra.mrb[0].mxu0 %v328
        %v458 = vpop.f32.mrb[0].mxu0
        %v459 = vadd.f32 0.0, %v458
        %v460 = vpop.f32.mrb[0].mxu0
        %461 = vmatprep.mubr.f32.mxu0 0.0
        %462 = vmatmul.mubr.f32.gmra.mrb[0].mxu0 %v329
        %v463 = vpop.f32.mrb[0].mxu0
        %v464 = vadd.f32 0.0, %v463
        %v465 = vpop.f32.mrb[0].mxu0
        %466 = vmatprep.mubr.f32.mxu0 0.0
        %467 = vmatmul.mubr.f32.gmra.mrb[0].mxu0 %v330
        %v468 = vpop.f32.mrb[0].mxu0
        %v469 = vadd.f32 0.0, %v468
        %v470 = vpop.f32.mrb[0].mxu0
        %471 = vmatprep.mubr.f32.mxu0 0.0
        %472 = vmatmul.mubr.f32.gmra.mrb[0].mxu0 %v331
        %v473 = vpop.f32.mrb[0].mxu0
        %v474 = vadd.f32 0.0, %v473
        %v475 = vpop.f32.mrb[0].mxu0
        %476 = vmatprep.mubr.f32.mxu0 0.0
        %477 = vmatmul.mubr.f32.gmra.mrb[0].mxu0 %v332
        %v478 = vpop.f32.mrb[0].mxu0
        %v479 = vadd.f32 0.0, %v478
        %v480 = vpop.f32.mrb[0].mxu0
        %481 = vmatprep.mubr.f32.mxu0 0.0
        %482 = vmatmul.mubr.f32.gmra.mrb[0].mxu0 %v333
        %v483 = vpop.f32.mrb[0].mxu0
        %v484 = vadd.f32 0.0, %v483
        %v485 = vpop.f32.mrb[0].mxu0
        %486 = vmatprep.mubr.f32.mxu0 0.0
        %487 = vmatmul.mubr.f32.gmra.mrb[0].mxu0 %v334
        %v488 = vpop.f32.mrb[0].mxu0
        %v489 = vadd.f32 0.0, %v488
        %v490 = vpop.f32.mrb[0].mxu0
        %491 = vmatprep.mubr.f32.mxu0 0.0
        %492 = vmatmul.mubr.f32.gmra.mrb[0].mxu0 %v335
        %v493 = vpop.f32.mrb[0].mxu0
        %v494 = vadd.f32 0.0, %v493
        %v495 = vpop.f32.mrb[0].mxu0
        %496 = vmatprep.mubr.f32.mxu0 0.0
        %497 = vmatmul.mubr.f32.gmra.mrb[0].mxu0 %v336
        %v498 = vpop.f32.mrb[0].mxu0
        %v499 = vadd.f32 0.0, %v498
        %v500 = vpop.f32.mrb[0].mxu0
        %501 = vmatprep.mubr.f32.mxu0 0.0
        %502 = vmatmul.mubr.f32.gmra.mrb[0].mxu0 %v337
        %v503 = vpop.f32.mrb[0].mxu0
        %v504 = vadd.f32 0.0, %v503
        %v505 = vpop.f32.mrb[0].mxu0
        %506 = vmatprep.mubr.f32.mxu0 0.0
        %507 = vmatmul.mubr.f32.gmra.mrb[0].mxu0 %v338
        %v508 = vpop.f32.mrb[0].mxu0
        %v509 = vadd.f32 0.0, %v508
        %v510 = vpop.f32.mrb[0].mxu0
        %511 = vmatprep.mubr.f32.mxu0 0.0
        %512 = vmatmul.mubr.f32.gmra.mrb[0].mxu0 %v339
        %v513 = vpop.f32.mrb[0].mxu0
        %v514 = vadd.f32 0.0, %v513
        %v515 = vpop.f32.mrb[0].mxu0
        %516 = vmatprep.mubr.f32.mxu0 0.0
        %517 = vmatmul.mubr.f32.gmra.mrb[0].mxu0 %v340
        %v518 = vpop.f32.mrb[0].mxu0
        %v519 = vadd.f32 0.0, %v518
        %v520 = vpop.f32.mrb[0].mxu0
        %521 = vmatprep.mubr.f32.mxu0 0.0
        %522 = vmatmul.mubr.f32.gmra.mrb[0].mxu0 %v341
        %v523 = vpop.f32.mrb[0].mxu0
        %v524 = vadd.f32 0.0, %v523
        %v525 = vpop.f32.mrb[0].mxu0
        %526 = vmatprep.mubr.f32.mxu0 0.0
        %527 = vmatmul.mubr.f32.gmra.mrb[0].mxu0 %v342
        %v528 = vpop.f32.mrb[0].mxu0
        %v529 = vadd.f32 0.0, %v528
        %v530 = vpop.f32.mrb[0].mxu0
        %531 = vmatprep.mubr.f32.mxu0 0.0
        %532 = vmatmul.mubr.f32.gmra.mrb[0].mxu0 %v343
        %v533 = vpop.f32.mrb[0].mxu0
        %v534 = vadd.f32 0.0, %v533
        %v535 = vpop.f32.mrb[0].mxu0
        %536 = vmatprep.mubr.f32.mxu0 0.0
        %537 = vmatmul.mubr.f32.gmra.mrb[0].mxu0 %v344
        %v538 = vpop.f32.mrb[0].mxu0
        %v539 = vadd.f32 0.0, %v538
        %v540 = vpop.f32.mrb[0].mxu0
        %541 = vmatprep.mubr.f32.mxu0 0.0
        %542 = vmatmul.mubr.f32.gmra.mrb[0].mxu0 %v345
        %v543 = vpop.f32.mrb[0].mxu0
        %v544 = vadd.f32 0.0, %v543
        %v545 = vpop.f32.mrb[0].mxu0
        %546 = vmatprep.mubr.f32.mxu0 0.0
        %547 = vmatmul.mubr.f32.gmra.mrb[0].mxu0 %v346
        %v548 = vpop.f32.mrb[0].mxu0
        %v549 = vadd.f32 0.0, %v548
        %v550 = vpop.f32.mrb[0].mxu0
        %551 = vmatprep.mubr.f32.mxu0 0.0
        %552 = vmatmul.mubr.f32.gmra.mrb[0].mxu0 %v347
        %v553 = vpop.f32.mrb[0].mxu0
        %v554 = vadd.f32 0.0, %v553
        %v555 = vpop.f32.mrb[0].mxu0
        %556 = vmatprep.mubr.f32.mxu0 0.0
        %557 = vmatmul.mubr.f32.gmra.mrb[0].mxu0 %v348
        %v558 = vpop.f32.mrb[0].mxu0
        %v559 = vadd.f32 0.0, %v558
        %v560 = vpop.f32.mrb[0].mxu0
        %561 = vmatprep.mubr.f32.mxu0 0.0
        %562 = vmatmul.mubr.f32.gmra.mrb[0].mxu0 %v349
        %v563 = vpop.f32.mrb[0].mxu0
        %v564 = vadd.f32 0.0, %v563
        %v565 = vpop.f32.mrb[0].mxu0
        %566 = vmatprep.mubr.f32.mxu0 0.0
        %567 = vmatmul.mubr.f32.gmra.mrb[0].mxu0 %v350
        %v568 = vpop.f32.mrb[0].mxu0
        %v569 = vadd.f32 0.0, %v568
        %v570 = vpop.f32.mrb[0].mxu0
        %571 = vmatprep.mubr.f32.mxu0 0.0
        %572 = vmatmul.mubr.f32.gmra.mrb[0].mxu0 %v351
        %v573 = vpop.f32.mrb[0].mxu0
        %v574 = vadd.f32 0.0, %v573
        %v575 = vpop.f32.mrb[0].mxu0
        %576 = vmatprep.mubr.f32.mxu0 0.0
        %577 = vmatmul.mubr.f32.gmra.mrb[0].mxu0 %v352
        %v578 = vpop.f32.mrb[0].mxu0
        %v579 = vadd.f32 0.0, %v578
        %v580 = vpop.f32.mrb[0].mxu0
        %581 = vmatprep.mubr.f32.mxu0 0.0
        %582 = vmatmul.mubr.f32.gmra.mrb[0].mxu0 %v353
        %v583 = vpop.f32.mrb[0].mxu0
        %v584 = vadd.f32 0.0, %v583
        %v585 = vpop.f32.mrb[0].mxu0
        %586 = vmatprep.mubr.f32.mxu0 0.0
        %587 = vmatmul.mubr.f32.gmra.mrb[0].mxu0 %v354
        %v588 = vpop.f32.mrb[0].mxu0
        %v589 = vadd.f32 0.0, %v588
        %v590 = vpop.f32.mrb[0].mxu0
        %591 = vmatprep.mubr.f32.mxu0 0.0
        %592 = vmatmul.mubr.f32.gmra.mrb[0].mxu0 %v355
        %v593 = vpop.f32.mrb[0].mxu0
        %v594 = vadd.f32 0.0, %v593
        %v595 = vpop.f32.mrb[0].mxu0
        %596 = vdwg.mxu0
        %v597 = vadd.f32 %v292, %v439
        %v598 = vadd.f32 %v293, %v444
        %v599 = vadd.f32 %v294, %v449
        %v600 = vadd.f32 %v295, %v454
        %v601 = vadd.f32 %v296, %v459
        %v602 = vadd.f32 %v297, %v464
        %v603 = vadd.f32 %v298, %v469
        %v604 = vadd.f32 %v299, %v474
        %v605 = vadd.f32 %v300, %v479
        %v606 = vadd.f32 %v301, %v484
        %v607 = vadd.f32 %v302, %v489
        %v608 = vadd.f32 %v303, %v494
        %v609 = vadd.f32 %v304, %v499
        %v610 = vadd.f32 %v305, %v504
        %v611 = vadd.f32 %v306, %v509
        %v612 = vadd.f32 %v307, %v514
        %v613 = vadd.f32 %v308, %v519
        %v614 = vadd.f32 %v309, %v524
        %v615 = vadd.f32 %v310, %v529
        %v616 = vadd.f32 %v311, %v534
        %v617 = vadd.f32 %v312, %v539
        %v618 = vadd.f32 %v313, %v544
        %v619 = vadd.f32 %v314, %v549
        %v620 = vadd.f32 %v315, %v554
        %v621 = vadd.f32 %v316, %v559
        %v622 = vadd.f32 %v317, %v564
        %v623 = vadd.f32 %v318, %v569
        %v624 = vadd.f32 %v319, %v574
        %v625 = vadd.f32 %v320, %v579
        %v626 = vadd.f32 %v321, %v584
        %v627 = vadd.f32 %v322, %v589
        %v628 = vadd.f32 %v323, %v594
        %629 = vst [vmem:[#allocation2] sm:$0xff] %v597
        %630 = vst [vmem:[#allocation2 + $0x8] sm:$0xff] %v598
        %631 = vst [vmem:[#allocation2 + $0x10] sm:$0xff] %v599
        %632 = vst [vmem:[#allocation2 + $0x18] sm:$0xff] %v600
        %633 = vst [vmem:[#allocation2 + $0x20] sm:$0xff] %v601
        %634 = vst [vmem:[#allocation2 + $0x28] sm:$0xff] %v602
        %635 = vst [vmem:[#allocation2 + $0x30] sm:$0xff] %v603
        %636 = vst [vmem:[#allocation2 + $0x38] sm:$0xff] %v604
        %637 = vst [vmem:[#allocation2 + $0x40] sm:$0xff] %v605
        %638 = vst [vmem:[#allocation2 + $0x48] sm:$0xff] %v606
        %639 = vst [vmem:[#allocation2 + $0x50] sm:$0xff] %v607
        %640 = vst [vmem:[#allocation2 + $0x58] sm:$0xff] %v608
        %641 = vst [vmem:[#allocation2 + $0x60] sm:$0xff] %v609
        %642 = vst [vmem:[#allocation2 + $0x68] sm:$0xff] %v610
        %643 = vst [vmem:[#allocation2 + $0x70] sm:$0xff] %v611
        %644 = vst [vmem:[#allocation2 + $0x78] sm:$0xff] %v612
        %645 = vst [vmem:[#allocation2 + $0x80] sm:$0xff] %v613
        %646 = vst [vmem:[#allocation2 + $0x88] sm:$0xff] %v614
        %647 = vst [vmem:[#allocation2 + $0x90] sm:$0xff] %v615
        %648 = vst [vmem:[#allocation2 + $0x98] sm:$0xff] %v616
        %649 = vst [vmem:[#allocation2 + $0xa0] sm:$0xff] %v617
        %650 = vst [vmem:[#allocation2 + $0xa8] sm:$0xff] %v618
        %651 = vst [vmem:[#allocation2 + $0xb0] sm:$0xff] %v619
        %652 = vst [vmem:[#allocation2 + $0xb8] sm:$0xff] %v620
        %653 = vst [vmem:[#allocation2 + $0xc0] sm:$0xff] %v621
        %654 = vst [vmem:[#allocation2 + $0xc8] sm:$0xff] %v622
        %655 = vst [vmem:[#allocation2 + $0xd0] sm:$0xff] %v623
        %656 = vst [vmem:[#allocation2 + $0xd8] sm:$0xff] %v624
        %657 = vst [vmem:[#allocation2 + $0xe0] sm:$0xff] %v625
        %658 = vst [vmem:[#allocation2 + $0xe8] sm:$0xff] %v626
        %659 = vst [vmem:[#allocation2 + $0xf0] sm:$0xff] %v627
        %660 = vst [vmem:[#allocation2 + $0xf8] sm:$0xff] %v628
        // Predicated region
        $region45: #{tpu_custom_call.1} parent=31 // pred_check
          %p661 = pneg %p256
        $region46: #{tpu_custom_call.1} parent=31 // pred_check_branch
          %663 = sbr.rel (%p661) target = $region48
        $region47: #{tpu_custom_call.1} parent=31 // pred_region
          %v664 = vld [vmem:[#allocation2] sm:$0xff]
          %v665 = vld [vmem:[#allocation2 + $0x8] sm:$0xff]
          %v666 = vld [vmem:[#allocation2 + $0x10] sm:$0xff]
          %v667 = vld [vmem:[#allocation2 + $0x18] sm:$0xff]
          %v668 = vld [vmem:[#allocation2 + $0x20] sm:$0xff]
          %v669 = vld [vmem:[#allocation2 + $0x28] sm:$0xff]
          %v670 = vld [vmem:[#allocation2 + $0x30] sm:$0xff]
          %v671 = vld [vmem:[#allocation2 + $0x38] sm:$0xff]
          %v672 = vld [vmem:[#allocation2 + $0x40] sm:$0xff]
          %v673 = vld [vmem:[#allocation2 + $0x48] sm:$0xff]
          %v674 = vld [vmem:[#allocation2 + $0x50] sm:$0xff]
          %v675 = vld [vmem:[#allocation2 + $0x58] sm:$0xff]
          %v676 = vld [vmem:[#allocation2 + $0x60] sm:$0xff]
          %v677 = vld [vmem:[#allocation2 + $0x68] sm:$0xff]
          %v678 = vld [vmem:[#allocation2 + $0x70] sm:$0xff]
          %v679 = vld [vmem:[#allocation2 + $0x78] sm:$0xff]
          %v680 = vld [vmem:[#allocation2 + $0x80] sm:$0xff]
          %v681 = vld [vmem:[#allocation2 + $0x88] sm:$0xff]
          %v682 = vld [vmem:[#allocation2 + $0x90] sm:$0xff]
          %v683 = vld [vmem:[#allocation2 + $0x98] sm:$0xff]
          %v684 = vld [vmem:[#allocation2 + $0xa0] sm:$0xff]
          %v685 = vld [vmem:[#allocation2 + $0xa8] sm:$0xff]
          %v686 = vld [vmem:[#allocation2 + $0xb0] sm:$0xff]
          %v687 = vld [vmem:[#allocation2 + $0xb8] sm:$0xff]
          %v688 = vld [vmem:[#allocation2 + $0xc0] sm:$0xff]
          %v689 = vld [vmem:[#allocation2 + $0xc8] sm:$0xff]
          %v690 = vld [vmem:[#allocation2 + $0xd0] sm:$0xff]
          %v691 = vld [vmem:[#allocation2 + $0xd8] sm:$0xff]
          %v692 = vld [vmem:[#allocation2 + $0xe0] sm:$0xff]
          %v693 = vld [vmem:[#allocation2 + $0xe8] sm:$0xff]
          %v694 = vld [vmem:[#allocation2 + $0xf0] sm:$0xff]
          %v695 = vld [vmem:[#allocation2 + $0xf8] sm:$0xff]
          %v696 = vld [vmem:[%s254] sm:$0x1]
          %v698 = vlaneseq
          %v699 = vshrl.u32 %v698, 7
          %v700 = vsub.s32 0, %v699
          %v701 = vrot.slane %v696, %v700
          %v703 = vadd.f32 %v664, %v701
          %v704 = vadd.f32 %v665, %v701
          %v705 = vadd.f32 %v666, %v701
          %v706 = vadd.f32 %v667, %v701
          %v707 = vadd.f32 %v668, %v701
          %v708 = vadd.f32 %v669, %v701
          %v709 = vadd.f32 %v670, %v701
          %v710 = vadd.f32 %v671, %v701
          %v711 = vadd.f32 %v672, %v701
          %v712 = vadd.f32 %v673, %v701
          %v713 = vadd.f32 %v674, %v701
          %v714 = vadd.f32 %v675, %v701
          %v715 = vadd.f32 %v676, %v701
          %v716 = vadd.f32 %v677, %v701
          %v717 = vadd.f32 %v678, %v701
          %v718 = vadd.f32 %v679, %v701
          %v719 = vadd.f32 %v680, %v701
          %v720 = vadd.f32 %v681, %v701
          %v721 = vadd.f32 %v682, %v701
          %v722 = vadd.f32 %v683, %v701
          %v723 = vadd.f32 %v684, %v701
          %v724 = vadd.f32 %v685, %v701
          %v725 = vadd.f32 %v686, %v701
          %v726 = vadd.f32 %v687, %v701
          %v727 = vadd.f32 %v688, %v701
          %v728 = vadd.f32 %v689, %v701
          %v729 = vadd.f32 %v690, %v701
          %v730 = vadd.f32 %v691, %v701
          %v731 = vadd.f32 %v692, %v701
          %v732 = vadd.f32 %v693, %v701
          %v733 = vadd.f32 %v694, %v701
          %v734 = vadd.f32 %v695, %v701
          %735 = vst [vmem:[%s249] sm:$0xff] %v703
          %736 = vst [vmem:[%s249 + $0x8] sm:$0xff] %v704
          %737 = vst [vmem:[%s249 + $0x10] sm:$0xff] %v705
          %738 = vst [vmem:[%s249 + $0x18] sm:$0xff] %v706
          %739 = vst [vmem:[%s249 + $0x20] sm:$0xff] %v707
          %740 = vst [vmem:[%s249 + $0x28] sm:$0xff] %v708
          %741 = vst [vmem:[%s249 + $0x30] sm:$0xff] %v709
          %742 = vst [vmem:[%s249 + $0x38] sm:$0xff] %v710
          %743 = vst [vmem:[%s249 + $0x40] sm:$0xff] %v711
          %744 = vst [vmem:[%s249 + $0x48] sm:$0xff] %v712
          %745 = vst [vmem:[%s249 + $0x50] sm:$0xff] %v713
          %746 = vst [vmem:[%s249 + $0x58] sm:$0xff] %v714
          %747 = vst [vmem:[%s249 + $0x60] sm:$0xff] %v715
          %748 = vst [vmem:[%s249 + $0x68] sm:$0xff] %v716
          %749 = vst [vmem:[%s249 + $0x70] sm:$0xff] %v717
          %750 = vst [vmem:[%s249 + $0x78] sm:$0xff] %v718
          %751 = vst [vmem:[%s249 + $0x80] sm:$0xff] %v719
          %752 = vst [vmem:[%s249 + $0x88] sm:$0xff] %v720
          %753 = vst [vmem:[%s249 + $0x90] sm:$0xff] %v721
          %754 = vst [vmem:[%s249 + $0x98] sm:$0xff] %v722
          %755 = vst [vmem:[%s249 + $0xa0] sm:$0xff] %v723
          %756 = vst [vmem:[%s249 + $0xa8] sm:$0xff] %v724
          %757 = vst [vmem:[%s249 + $0xb0] sm:$0xff] %v725
          %758 = vst [vmem:[%s249 + $0xb8] sm:$0xff] %v726
          %759 = vst [vmem:[%s249 + $0xc0] sm:$0xff] %v727
          %760 = vst [vmem:[%s249 + $0xc8] sm:$0xff] %v728
          %761 = vst [vmem:[%s249 + $0xd0] sm:$0xff] %v729
          %762 = vst [vmem:[%s249 + $0xd8] sm:$0xff] %v730
          %763 = vst [vmem:[%s249 + $0xe0] sm:$0xff] %v731
          %764 = vst [vmem:[%s249 + $0xe8] sm:$0xff] %v732
          %765 = vst [vmem:[%s249 + $0xf0] sm:$0xff] %v733
          %766 = vst [vmem:[%s249 + $0xf8] sm:$0xff] %v734
        $region48: #{tpu_custom_call.1} parent=31 // pred_fallthru
          _
        %s767 = sand.u32 %s132, 1
        %s768 = scalar_lea.sflag [#allocation5], %s767
        %s769 = sand.u32 %s132, 1
        %s770 = smul.addr %s769, 256
        %s771 = scalar_lea.vmem [#allocation8], %s770
        // Predicated region
        $region49: #{tpu_custom_call.1} parent=31 // pred_check
          %p772 = pneg %p142
        $region50: #{tpu_custom_call.1} parent=31 // pred_check_branch
          %774 = sbr.rel (%p772) target = $region52
        $region51: #{tpu_custom_call.1} parent=31 // pred_region
          %s775 = smul.u32 32, %s26
          %s777 = ssub.s32 4096, 4096
          %778 = vsyncadd %s768, %s777
          %s779 = sadd.s32 %s27, %s775
          %s780 = smul.addr %s779, 128
          %s781 = scalar_lea.hbm %s3, %s780
          %s782 = sshll.u32 %s771, 4
          %s783 = int_to_ptr.vmem [resolvable:$true] %s782
          %788 = dma.vmem_to_hbm [thread:$0]  %s783, 4096, %s781, %s768, 128, 128, 8
        $region52: #{tpu_custom_call.1} parent=31 // pred_fallthru
          _
      $region32: #{tpu_custom_call.1} parent=5 // pred_fallthru
        _
      %p789 = scmp.le.s32.totalorder 2, %s16
      // Predicated region
      $region53: #{tpu_custom_call.1} parent=5 // pred_check
        %p790 = pneg %p789
      $region54: #{tpu_custom_call.1} parent=5 // pred_check_branch
        %792 = sbr.rel (%p790) target = $region56
      $region55: #{tpu_custom_call.1} parent=5 // pred_region
        %s793 = ssub.s32 %s16, 2
        // Predicated region
        $region57: #{tpu_custom_call.1} parent=55 // pred_check
          %p794 = pneg %p148
        $region58: #{tpu_custom_call.1} parent=55 // pred_check_branch
          %796 = sbr.rel (%p794) target = $region60
        $region59: #{tpu_custom_call.1} parent=55 // pred_region
          %s797 = sand.u32 %s133, 1
          %s798 = scalar_lea.sflag [#allocation5], %s797
          %s799 = sand.u32 %s133, 1
          %s800 = smul.addr %s799, 256
          %s801 = scalar_lea.vmem [#allocation8], %s800
          %802 = dma.done %s798, 4096
        $region60: #{tpu_custom_call.1} parent=55 // pred_fallthru
          _
      $region56: #{tpu_custom_call.1} parent=5 // pred_fallthru
        _
    $region6: #{tpu_custom_call.1} parent=1 // loop_footer
      %s20 = sadd.s32 1, %s16
    $region7: #{tpu_custom_call.1} parent=1 // loop_footer_branch
      %15 = sbr.rel target = $region3
    $region8: #{tpu_custom_call.1} parent=1 // loop_exit
      _
    %803 = vsyncpa [#allocation4], 1
    %s804 = scalar_lea.sflag [#allocation4], 1
    %805 = vsyncpa %s804, 1
    %806 = vsyncpa [#allocation7], 1
    %807 = vsyncpa [#allocation5], 1
    %s808 = scalar_lea.sflag [#allocation5], 1
    %809 = vsyncpa %s808, 1

</llo_original>
